<compile_context>
chip_gen: v5e
topology: v5e:2x2
jax: 0.10.0
libtpu: 0.0.40
codegen_flags: <defaults>
</compile_context>

<pallas_src>
import functools

import jax
import jax.numpy as jnp
from jax.experimental import pallas as pl
from jax.experimental.pallas import tpu as pltpu

OUT_PAD = 8         # final layer padded to 8 output columns (full-array-dim block)
MAX_TB = 4096       # max batch-tile rows per grid step (multiple of 16)


def mlp_kernel(x_ref,
               w1_ref, b1_ref,
               w2_ref, b2_ref,
               w3_ref, b3_ref,
               w4_ref, b4_ref,
               w5_ref, b5_ref,
               o_ref):
    """One batch tile of the 5-layer MLP.  bf16 operands, f32 MXU accumulation."""
    h = x_ref[...]  # (TB, 14) bf16

    h = jnp.dot(h, w1_ref[...], preferred_element_type=jnp.float32) + b1_ref[...]
    h = jnp.maximum(h, 0.0).astype(jnp.bfloat16)

    h = jnp.dot(h, w2_ref[...], preferred_element_type=jnp.float32) + b2_ref[...]
    h = jnp.maximum(h, 0.0).astype(jnp.bfloat16)

    h = jnp.dot(h, w3_ref[...], preferred_element_type=jnp.float32) + b3_ref[...]
    h = jnp.maximum(h, 0.0).astype(jnp.bfloat16)

    h = jnp.dot(h, w4_ref[...], preferred_element_type=jnp.float32) + b4_ref[...]
    h = jnp.maximum(h, 0.0).astype(jnp.bfloat16)

    h = jnp.dot(h, w5_ref[...], preferred_element_type=jnp.float32) + b5_ref[...]
    o_ref[...] = h.astype(o_ref.dtype)  # (TB, 8) f32 store (tiny writeback)


def _round_up(n, m):
    return ((n + m - 1) // m) * m


def _choose_tiling(b):
    """Pick (tb, b_pad): tb multiple of 16, <= MAX_TB, tb divides b_pad,
    and b_pad - b bounded by a few * 16 rows (no 2x padding blowups)."""
    b16 = _round_up(max(b, 1), 16)
    n_steps = (b16 + MAX_TB - 1) // MAX_TB
    tb = _round_up((b16 + n_steps - 1) // n_steps, 16)
    b_pad = n_steps * tb
    return tb, b_pad


@functools.partial(jax.jit, static_argnames=("tb",))
def _mlp_forward_padded(x_pad_bf16, flat_params, *, tb):
    """x_pad_bf16: (B_pad, 14) bf16, B_pad % tb == 0.  Returns (B_pad, 8) f32."""
    b_pad, in_dim = x_pad_bf16.shape
    grid = (b_pad // tb,)

    in_specs = [pl.BlockSpec((tb, in_dim), lambda i: (i, 0))]
    for p in flat_params:
        r, c = p.shape
        # Constant index_map -> weights/biases stay VMEM-resident across steps.
        in_specs.append(pl.BlockSpec((r, c), lambda i: (0, 0)))

    out_specs = pl.BlockSpec((tb, OUT_PAD), lambda i: (i, 0))

    return pl.pallas_call(
        mlp_kernel,
        out_shape=jax.ShapeDtypeStruct((b_pad, OUT_PAD), jnp.float32),
        grid=grid,
        in_specs=in_specs,
        out_specs=out_specs,
        compiler_params=pltpu.CompilerParams(
            dimension_semantics=("parallel",)),
    )(x_pad_bf16, *flat_params)


def pack_params(params):
    """One-time packing: weights -> bf16, biases f32, last layer padded to 8 cols."""
    flat = []
    n_layers = len(params)
    for li, (w, b) in enumerate(params):
        if li == n_layers - 1:
            w = jnp.pad(w, ((0, 0), (0, OUT_PAD - w.shape[1])))
            b = jnp.pad(b, ((0, 0), (0, OUT_PAD - b.shape[1])))
        flat.append(jnp.asarray(w, jnp.bfloat16))
        flat.append(jnp.asarray(b, jnp.float32))
    return tuple(flat)


def mlp_forward(x, packed_params, out_dim=7):
    """x: (B, 14) float32.  packed_params: output of pack_params()."""
    B = x.shape[0]
    tb, b_pad = _choose_tiling(B)
    x_pad = jnp.pad(x, ((0, b_pad - B), (0, 0))).astype(jnp.bfloat16)
    out_pad = _mlp_forward_padded(x_pad, packed_params, tb=tb)
    return out_pad[:B, :out_dim]


def init_params(key):
    """nn.Linear-style init, stored transposed: W (in, out), b (1, out), f32."""
    dims = [(14, 64), (64, 128), (128, 64), (64, 16), (16, 7)]
    params = []
    for fan_in, fan_out in dims:
        kw, kb, key = jax.random.split(key, 3)
        bound = 1.0 / jnp.sqrt(fan_in)
        w = jax.random.uniform(kw, (fan_in, fan_out), jnp.float32, -bound, bound)
        b = jax.random.uniform(kb, (1, fan_out), jnp.float32, -bound, bound)
        params.append((w, b))
    return params


def mlp_reference_bf16(x, params):
    """Pure-JAX reference mirroring the kernel's bf16 operand / f32 accumulate scheme."""
    h = x.astype(jnp.bfloat16)
    n = len(params)
    for i, (w, b) in enumerate(params):
        w_bf = w.astype(jnp.bfloat16).astype(jnp.float32)
        h = jnp.dot(h.astype(jnp.float32), w_bf) + b
        if i < n - 1:
            h = jnp.maximum(h, 0.0).astype(jnp.bfloat16)
    return h


def mlp_reference_f32(x, params):
    h = x
    for i, (w, b) in enumerate(params):
        h = h @ w + b
        if i < len(params) - 1:
            h = jnp.maximum(h, 0.0)
    return h


if __name__ == "__main__":
    key = jax.random.PRNGKey(0)
    kx, kp = jax.random.split(key)

    B = 8
    x = jax.random.normal(kx, (B, 14), jnp.float32)
    params = init_params(kp)
    packed = pack_params(params)          # packed once, reused across calls

    out = mlp_forward(x, packed)
    out = jax.block_until_ready(out)
    assert out.shape == (B, 7), out.shape

    # Tight check vs a reference that mirrors the kernel's bf16 casting.
    ref_bf = mlp_reference_bf16(x, params)
    assert jnp.allclose(out, ref_bf, atol=1e-3, rtol=1e-3), "mismatch vs bf16 reference"

    # Loose sanity check vs the full-f32 PyTorch-equivalent forward.
    ref_f32 = mlp_reference_f32(x, params)
    assert jnp.allclose(out, ref_f32, atol=5e-2, rtol=5e-2), "mismatch vs f32 reference"

    # Also exercise a larger, non-tile-aligned batch to cover the multi-step grid path.
    B2 = 4100
    x2 = jax.random.normal(jax.random.PRNGKey(1), (B2, 14), jnp.float32)
    out2 = jax.block_until_ready(mlp_forward(x2, packed))
    ref2 = mlp_reference_bf16(x2, params)
    assert out2.shape == (B2, 7)
    assert jnp.allclose(out2, ref2, atol=1e-3, rtol=1e-3), "mismatch on large batch"

    print("KERNEL_OK")
</pallas_src>

<mosaic_0001>
module attributes {stable_mosaic.version = 11 : i64} {
  func.func @mlp_kernel(%arg0: i32, %arg1: memref<16x14xbf16, #tpu.memory_space<vmem>>, %arg2: memref<14x64xbf16, #tpu.memory_space<vmem>>, %arg3: memref<1x64xf32, #tpu.memory_space<vmem>>, %arg4: memref<64x128xbf16, #tpu.memory_space<vmem>>, %arg5: memref<1x128xf32, #tpu.memory_space<vmem>>, %arg6: memref<128x64xbf16, #tpu.memory_space<vmem>>, %arg7: memref<1x64xf32, #tpu.memory_space<vmem>>, %arg8: memref<64x16xbf16, #tpu.memory_space<vmem>>, %arg9: memref<1x16xf32, #tpu.memory_space<vmem>>, %arg10: memref<16x8xbf16, #tpu.memory_space<vmem>>, %arg11: memref<1x8xf32, #tpu.memory_space<vmem>>, %arg12: memref<16x8xf32, #tpu.memory_space<vmem>>) attributes {dimension_semantics = [#tpu.dimension_semantics<parallel>], iteration_bounds = array<i64: 1>, scalar_prefetch = 0 : i64, scratch_operands = 0 : i64, tpu.core_type = #tpu.core_type<tc>, window_params = [{transform_indices = @transform_0, window_bounds = array<i64: 16, 14>}, {pipeline_mode = #tpu.pipeline_mode<synchronous>, transform_indices = @transform_1, window_bounds = array<i64: 14, 64>}, {pipeline_mode = #tpu.pipeline_mode<synchronous>, transform_indices = @transform_2, window_bounds = array<i64: 1, 64>}, {pipeline_mode = #tpu.pipeline_mode<synchronous>, transform_indices = @transform_3, window_bounds = array<i64: 64, 128>}, {pipeline_mode = #tpu.pipeline_mode<synchronous>, transform_indices = @transform_4, window_bounds = array<i64: 1, 128>}, {pipeline_mode = #tpu.pipeline_mode<synchronous>, transform_indices = @transform_5, window_bounds = array<i64: 128, 64>}, {pipeline_mode = #tpu.pipeline_mode<synchronous>, transform_indices = @transform_6, window_bounds = array<i64: 1, 64>}, {pipeline_mode = #tpu.pipeline_mode<synchronous>, transform_indices = @transform_7, window_bounds = array<i64: 64, 16>}, {pipeline_mode = #tpu.pipeline_mode<synchronous>, transform_indices = @transform_8, window_bounds = array<i64: 1, 16>}, {pipeline_mode = #tpu.pipeline_mode<synchronous>, transform_indices = @transform_9, window_bounds = array<i64: 16, 8>}, {pipeline_mode = #tpu.pipeline_mode<synchronous>, transform_indices = @transform_10, window_bounds = array<i64: 1, 8>}, {transform_indices = @transform_11, window_bounds = array<i64: 16, 8>}]} {
    %c0 = arith.constant 0 : index
    %c0_0 = arith.constant 0 : index
    %0 = vector.load %arg1[%c0, %c0_0] : memref<16x14xbf16, #tpu.memory_space<vmem>>, vector<16x14xbf16>
    %c0_1 = arith.constant 0 : index
    %c0_2 = arith.constant 0 : index
    %1 = vector.load %arg2[%c0_1, %c0_2] : memref<14x64xbf16, #tpu.memory_space<vmem>>, vector<14x64xbf16>
    %cst = arith.constant dense<0.000000e+00> : vector<16x64xf32>
    %2 = tpu.matmul %0, %1, %cst {dimension_numbers = #tpu.dot_dimension_numbers<[1], [0], [0], [1], [0, 0, 1, 1], [], []>} : vector<16x14xbf16>, vector<14x64xbf16>, vector<16x64xf32> -> vector<16x64xf32>
    %c0_3 = arith.constant 0 : index
    %c0_4 = arith.constant 0 : index
    %3 = vector.load %arg3[%c0_3, %c0_4] : memref<1x64xf32, #tpu.memory_space<vmem>>, vector<1x64xf32>
    %4 = vector.broadcast %3 : vector<1x64xf32> to vector<16x64xf32>
    %5 = arith.addf %2, %4 : vector<16x64xf32>
    %cst_5 = arith.constant 0.000000e+00 : f32
    %6 = vector.broadcast %cst_5 : f32 to vector<16x64xf32>
    %7 = arith.maximumf %5, %6 : vector<16x64xf32>
    %8 = arith.truncf %7 : vector<16x64xf32> to vector<16x64xbf16>
    %c0_6 = arith.constant 0 : index
    %c0_7 = arith.constant 0 : index
    %9 = vector.load %arg4[%c0_6, %c0_7] : memref<64x128xbf16, #tpu.memory_space<vmem>>, vector<64x128xbf16>
    %cst_8 = arith.constant dense<0.000000e+00> : vector<16x128xf32>
    %10 = tpu.matmul %8, %9, %cst_8 {dimension_numbers = #tpu.dot_dimension_numbers<[1], [0], [0], [1], [0, 0, 1, 1], [], []>} : vector<16x64xbf16>, vector<64x128xbf16>, vector<16x128xf32> -> vector<16x128xf32>
    %c0_9 = arith.constant 0 : index
    %c0_10 = arith.constant 0 : index
    %11 = vector.load %arg5[%c0_9, %c0_10] : memref<1x128xf32, #tpu.memory_space<vmem>>, vector<1x128xf32>
    %12 = vector.broadcast %11 : vector<1x128xf32> to vector<16x128xf32>
    %13 = arith.addf %10, %12 : vector<16x128xf32>
    %cst_11 = arith.constant 0.000000e+00 : f32
    %14 = vector.broadcast %cst_11 : f32 to vector<16x128xf32>
    %15 = arith.maximumf %13, %14 : vector<16x128xf32>
    %16 = arith.truncf %15 : vector<16x128xf32> to vector<16x128xbf16>
    %c0_12 = arith.constant 0 : index
    %c0_13 = arith.constant 0 : index
    %17 = vector.load %arg6[%c0_12, %c0_13] : memref<128x64xbf16, #tpu.memory_space<vmem>>, vector<128x64xbf16>
    %cst_14 = arith.constant dense<0.000000e+00> : vector<16x64xf32>
    %18 = tpu.matmul %16, %17, %cst_14 {dimension_numbers = #tpu.dot_dimension_numbers<[1], [0], [0], [1], [0, 0, 1, 1], [], []>} : vector<16x128xbf16>, vector<128x64xbf16>, vector<16x64xf32> -> vector<16x64xf32>
    %c0_15 = arith.constant 0 : index
    %c0_16 = arith.constant 0 : index
    %19 = vector.load %arg7[%c0_15, %c0_16] : memref<1x64xf32, #tpu.memory_space<vmem>>, vector<1x64xf32>
    %20 = vector.broadcast %19 : vector<1x64xf32> to vector<16x64xf32>
    %21 = arith.addf %18, %20 : vector<16x64xf32>
    %cst_17 = arith.constant 0.000000e+00 : f32
    %22 = vector.broadcast %cst_17 : f32 to vector<16x64xf32>
    %23 = arith.maximumf %21, %22 : vector<16x64xf32>
    %24 = arith.truncf %23 : vector<16x64xf32> to vector<16x64xbf16>
    %c0_18 = arith.constant 0 : index
    %c0_19 = arith.constant 0 : index
    %25 = vector.load %arg8[%c0_18, %c0_19] : memref<64x16xbf16, #tpu.memory_space<vmem>>, vector<64x16xbf16>
    %cst_20 = arith.constant dense<0.000000e+00> : vector<16x16xf32>
    %26 = tpu.matmul %24, %25, %cst_20 {dimension_numbers = #tpu.dot_dimension_numbers<[1], [0], [0], [1], [0, 0, 1, 1], [], []>} : vector<16x64xbf16>, vector<64x16xbf16>, vector<16x16xf32> -> vector<16x16xf32>
    %c0_21 = arith.constant 0 : index
    %c0_22 = arith.constant 0 : index
    %27 = vector.load %arg9[%c0_21, %c0_22] : memref<1x16xf32, #tpu.memory_space<vmem>>, vector<1x16xf32>
    %28 = vector.broadcast %27 : vector<1x16xf32> to vector<16x16xf32>
    %29 = arith.addf %26, %28 : vector<16x16xf32>
    %cst_23 = arith.constant 0.000000e+00 : f32
    %30 = vector.broadcast %cst_23 : f32 to vector<16x16xf32>
    %31 = arith.maximumf %29, %30 : vector<16x16xf32>
    %32 = arith.truncf %31 : vector<16x16xf32> to vector<16x16xbf16>
    %c0_24 = arith.constant 0 : index
    %c0_25 = arith.constant 0 : index
    %33 = vector.load %arg10[%c0_24, %c0_25] : memref<16x8xbf16, #tpu.memory_space<vmem>>, vector<16x8xbf16>
    %cst_26 = arith.constant dense<0.000000e+00> : vector<16x8xf32>
    %34 = tpu.matmul %32, %33, %cst_26 {dimension_numbers = #tpu.dot_dimension_numbers<[1], [0], [0], [1], [0, 0, 1, 1], [], []>} : vector<16x16xbf16>, vector<16x8xbf16>, vector<16x8xf32> -> vector<16x8xf32>
    %c0_27 = arith.constant 0 : index
    %c0_28 = arith.constant 0 : index
    %35 = vector.load %arg11[%c0_27, %c0_28] : memref<1x8xf32, #tpu.memory_space<vmem>>, vector<1x8xf32>
    %36 = vector.broadcast %35 : vector<1x8xf32> to vector<16x8xf32>
    %37 = arith.addf %34, %36 : vector<16x8xf32>
    %c0_29 = arith.constant 0 : index
    %c0_30 = arith.constant 0 : index
    %38 = vector.load %arg12[%c0_29, %c0_30] : memref<16x8xf32, #tpu.memory_space<vmem>>, vector<16x8xf32>
    tpu.vector_store %arg12[%c0_29, %c0_30], %37 {strides = array<i32>} : memref<16x8xf32, #tpu.memory_space<vmem>>, vector<16x8xf32>,
    return
  }
  func.func @transform_0(%arg0: i32) -> (i32, i32) {
    %c0_i32 = arith.constant 0 : i32
    %c0_i32_0 = arith.constant 0 : i32
    return %arg0, %c0_i32 : i32, i32
  }
  func.func @transform_1(%arg0: i32) -> (i32, i32) {
    %c0_i32 = arith.constant 0 : i32
    %c0_i32_0 = arith.constant 0 : i32
    %c0_i32_1 = arith.constant 0 : i32
    return %c0_i32, %c0_i32_0 : i32, i32
  }
  func.func @transform_2(%arg0: i32) -> (i32, i32) {
    %c0_i32 = arith.constant 0 : i32
    %c0_i32_0 = arith.constant 0 : i32
    %c0_i32_1 = arith.constant 0 : i32
    return %c0_i32, %c0_i32_0 : i32, i32
  }
  func.func @transform_3(%arg0: i32) -> (i32, i32) {
    %c0_i32 = arith.constant 0 : i32
    %c0_i32_0 = arith.constant 0 : i32
    %c0_i32_1 = arith.constant 0 : i32
    return %c0_i32, %c0_i32_0 : i32, i32
  }
  func.func @transform_4(%arg0: i32) -> (i32, i32) {
    %c0_i32 = arith.constant 0 : i32
    %c0_i32_0 = arith.constant 0 : i32
    %c0_i32_1 = arith.constant 0 : i32
    return %c0_i32, %c0_i32_0 : i32, i32
  }
  func.func @transform_5(%arg0: i32) -> (i32, i32) {
    %c0_i32 = arith.constant 0 : i32
    %c0_i32_0 = arith.constant 0 : i32
    %c0_i32_1 = arith.constant 0 : i32
    return %c0_i32, %c0_i32_0 : i32, i32
  }
  func.func @transform_6(%arg0: i32) -> (i32, i32) {
    %c0_i32 = arith.constant 0 : i32
    %c0_i32_0 = arith.constant 0 : i32
    %c0_i32_1 = arith.constant 0 : i32
    return %c0_i32, %c0_i32_0 : i32, i32
  }
  func.func @transform_7(%arg0: i32) -> (i32, i32) {
    %c0_i32 = arith.constant 0 : i32
    %c0_i32_0 = arith.constant 0 : i32
    %c0_i32_1 = arith.constant 0 : i32
    return %c0_i32, %c0_i32_0 : i32, i32
  }
  func.func @transform_8(%arg0: i32) -> (i32, i32) {
    %c0_i32 = arith.constant 0 : i32
    %c0_i32_0 = arith.constant 0 : i32
    %c0_i32_1 = arith.constant 0 : i32
    return %c0_i32, %c0_i32_0 : i32, i32
  }
  func.func @transform_9(%arg0: i32) -> (i32, i32) {
    %c0_i32 = arith.constant 0 : i32
    %c0_i32_0 = arith.constant 0 : i32
    %c0_i32_1 = arith.constant 0 : i32
    return %c0_i32, %c0_i32_0 : i32, i32
  }
  func.func @transform_10(%arg0: i32) -> (i32, i32) {
    %c0_i32 = arith.constant 0 : i32
    %c0_i32_0 = arith.constant 0 : i32
    %c0_i32_1 = arith.constant 0 : i32
    return %c0_i32, %c0_i32_0 : i32, i32
  }
  func.func @transform_11(%arg0: i32) -> (i32, i32) {
    %c0_i32 = arith.constant 0 : i32
    %c0_i32_0 = arith.constant 0 : i32
    return %arg0, %c0_i32 : i32, i32
  }
}

</mosaic_0001>

<llo_original>
// kernel: _mlp_forward_padded.1
$region0: #{_mlp_forward_padded.1}
  #allocation0 [shape = 'u32[]', space=smem, size = 0x4, offset = 0x4, fixed_abs, tag = 'smem constant byte address 0x4 - core index']
  #allocation1 [shape = 'u32[72,128]{1,0:T(1,128)}', space=vmem, size = 0x9000, scoped, tag = 'internal scratch']
  %s0 = inlined_call_operand.vmem [shape: bf16[16,14], index: 0, kind: input, shape index: {}]
  %s1 = inlined_call_operand.vmem [shape: bf16[14,64], index: 1, kind: input, shape index: {}]
  %s2 = inlined_call_operand.vmem [shape: f32[1,64], index: 2, kind: input, shape index: {}]
  %s3 = inlined_call_operand.vmem [shape: bf16[64,128], index: 3, kind: input, shape index: {}]
  %s4 = inlined_call_operand.vmem [shape: f32[1,128], index: 4, kind: input, shape index: {}]
  %s5 = inlined_call_operand.vmem [shape: bf16[128,64], index: 5, kind: input, shape index: {}]
  %s6 = inlined_call_operand.vmem [shape: f32[1,64], index: 6, kind: input, shape index: {}]
  %s7 = inlined_call_operand.vmem [shape: bf16[64,16], index: 7, kind: input, shape index: {}]
  %s8 = inlined_call_operand.vmem [shape: f32[1,16], index: 8, kind: input, shape index: {}]
  %s9 = inlined_call_operand.vmem [shape: bf16[16,8], index: 9, kind: input, shape index: {}]
  %s10 = inlined_call_operand.vmem [shape: f32[1,8], index: 10, kind: input, shape index: {}]
  %s11 = inlined_call_operand.vmem [shape: f32[16,8], index: 11, kind: output, shape index: {}]
  %s12 = sld [smem:[#allocation0]]
  $region54: #{_mlp_forward_padded.1} parent=0
    _
  %s14 = ssub.s32 1, %s12
  %s15 = scalar_select 0, %s14, %s12
  // Predicated region
  $region2: #{_mlp_forward_padded.1} parent=0 // pred_check
    _
  $region3: #{_mlp_forward_padded.1} parent=0 // pred_check_branch
    %17 = sbr.rel (0) target = $region5
  $region4: #{_mlp_forward_padded.1} parent=0 // pred_region
    _
  $region5: #{_mlp_forward_padded.1} parent=0 // pred_fallthru
    _
  // Predicated region
  $region6: #{_mlp_forward_padded.1} parent=0 // pred_check
    _
  $region7: #{_mlp_forward_padded.1} parent=0 // pred_check_branch
    %19 = sbr.rel (0) target = $region9
  $region8: #{_mlp_forward_padded.1} parent=0 // pred_region
    _
  $region9: #{_mlp_forward_padded.1} parent=0 // pred_fallthru
    _
  // Predicated region
  $region10: #{_mlp_forward_padded.1} parent=0 // pred_check
    _
  $region11: #{_mlp_forward_padded.1} parent=0 // pred_check_branch
    %21 = sbr.rel (0) target = $region13
  $region12: #{_mlp_forward_padded.1} parent=0 // pred_region
    _
  $region13: #{_mlp_forward_padded.1} parent=0 // pred_fallthru
    _
  // Predicated region
  $region14: #{_mlp_forward_padded.1} parent=0 // pred_check
    _
  $region15: #{_mlp_forward_padded.1} parent=0 // pred_check_branch
    %23 = sbr.rel (0) target = $region17
  $region16: #{_mlp_forward_padded.1} parent=0 // pred_region
    _
  $region17: #{_mlp_forward_padded.1} parent=0 // pred_fallthru
    _
  // Predicated region
  $region18: #{_mlp_forward_padded.1} parent=0 // pred_check
    _
  $region19: #{_mlp_forward_padded.1} parent=0 // pred_check_branch
    %25 = sbr.rel (0) target = $region21
  $region20: #{_mlp_forward_padded.1} parent=0 // pred_region
    _
  $region21: #{_mlp_forward_padded.1} parent=0 // pred_fallthru
    _
  // Predicated region
  $region22: #{_mlp_forward_padded.1} parent=0 // pred_check
    _
  $region23: #{_mlp_forward_padded.1} parent=0 // pred_check_branch
    %27 = sbr.rel (0) target = $region25
  $region24: #{_mlp_forward_padded.1} parent=0 // pred_region
    _
  $region25: #{_mlp_forward_padded.1} parent=0 // pred_fallthru
    _
  // Predicated region
  $region26: #{_mlp_forward_padded.1} parent=0 // pred_check
    _
  $region27: #{_mlp_forward_padded.1} parent=0 // pred_check_branch
    %29 = sbr.rel (0) target = $region29
  $region28: #{_mlp_forward_padded.1} parent=0 // pred_region
    _
  $region29: #{_mlp_forward_padded.1} parent=0 // pred_fallthru
    _
  // Predicated region
  $region30: #{_mlp_forward_padded.1} parent=0 // pred_check
    _
  $region31: #{_mlp_forward_padded.1} parent=0 // pred_check_branch
    %31 = sbr.rel (0) target = $region33
  $region32: #{_mlp_forward_padded.1} parent=0 // pred_region
    _
  $region33: #{_mlp_forward_padded.1} parent=0 // pred_fallthru
    _
  // Predicated region
  $region34: #{_mlp_forward_padded.1} parent=0 // pred_check
    _
  $region35: #{_mlp_forward_padded.1} parent=0 // pred_check_branch
    %33 = sbr.rel (0) target = $region37
  $region36: #{_mlp_forward_padded.1} parent=0 // pred_region
    _
  $region37: #{_mlp_forward_padded.1} parent=0 // pred_fallthru
    _
  // Predicated region
  $region38: #{_mlp_forward_padded.1} parent=0 // pred_check
    _
  $region39: #{_mlp_forward_padded.1} parent=0 // pred_check_branch
    %35 = sbr.rel (0) target = $region41
  $region40: #{_mlp_forward_padded.1} parent=0 // pred_region
    _
  $region41: #{_mlp_forward_padded.1} parent=0 // pred_fallthru
    _
  // Predicated region
  $region42: #{_mlp_forward_padded.1} parent=0 // pred_check
    _
  $region43: #{_mlp_forward_padded.1} parent=0 // pred_check_branch
    %37 = sbr.rel (0) target = $region45
  $region44: #{_mlp_forward_padded.1} parent=0 // pred_region
    _
  $region45: #{_mlp_forward_padded.1} parent=0 // pred_fallthru
    _
  %v39 = vld [vmem:[%s0] sm:$0xf]
  %v40 = vld [vmem:[%s0 + $0x4] sm:$0xf]
  %v41 = vld [vmem:[%s1] sm:$0xf]
  %v42 = vld [vmem:[%s1 + $0x4] sm:$0x7]
  %v43 = vld [vmem:[%s2] sm:$0x1]
  %v45 = vperm.slane %v43, 0
  %v49 = vunpack.c.l.b16 %v39
  %v50 = vunpack.c.l.b16 %v40
  %v51 = vpack.c.b16 %v50, %v49
  %v54 = vunpack.c.l.b16 %v41
  %v55 = vunpack.c.l.b16 %v42
  %v56 = vpack.c.b16 %v55, %v54
  %vm57 = vcmask 113664
  %v59 = vsel %vm57, %v51, 0
  %vm61 = vcmask 1046528
  %v63 = vsel %vm61, %v56, 0
  %65 = vmatpush.bf16.msra.mxu0 0
  %66 = vmatpush.bf16.msra.mxu0 0
  %67 = vmatpush.bf16.msra.mxu0 0
  %68 = vmatpush.bf16.msra.mxu0 0
  %69 = vmatpush.bf16.msra.mxu0 0
  %70 = vmatpush.bf16.msra.mxu0 0
  %71 = vmatpush.bf16.msra.mxu0 0
  %72 = vmatpush.bf16.msra.mxu0 %v63
  %73 = vmatmul.bf16.gmra.mxu0 %v59
  %v74 = vpop.f32.mrf.mxu0
  %v75 = vadd.f32 %v45, %v74
  %v76 = vpop.f32.mrf.mxu0
  %v77 = vadd.f32 %v45, %v76
  %78 = vdwg.mxu0
  %v79 = vmax.f32 %v75, 0.0
  %v80 = vmax.f32 %v77, 0.0
  %v81 = vpack.c.bf16 %v80, %v79
  %v82 = vld [vmem:[%s3] sm:$0xf]
  %v83 = vld [vmem:[%s3 + $0x4] sm:$0xf]
  %v84 = vld [vmem:[%s3 + $0x8] sm:$0xf]
  %v85 = vld [vmem:[%s3 + $0xc] sm:$0xf]
  %v86 = vld [vmem:[%s3 + $0x10] sm:$0xf]
  %v87 = vld [vmem:[%s3 + $0x14] sm:$0xf]
  %v88 = vld [vmem:[%s3 + $0x18] sm:$0xf]
  %v89 = vld [vmem:[%s3 + $0x1c] sm:$0xf]
  %v90 = vld [vmem:[%s4] sm:$0x1]
  %v92 = vperm.slane %v90, 0
  %v102 = vunpack.c.l.b16 %v82
  %v103 = vunpack.c.l.b16 %v83
  %v104 = vunpack.c.l.b16 %v84
  %v105 = vunpack.c.l.b16 %v85
  %v106 = vunpack.c.l.b16 %v86
  %v107 = vunpack.c.l.b16 %v87
  %v108 = vunpack.c.l.b16 %v88
  %v109 = vunpack.c.l.b16 %v89
  %v110 = vpack.c.b16 %v103, %v102
  %v111 = vpack.c.b16 %v105, %v104
  %v112 = vpack.c.b16 %v107, %v106
  %v113 = vpack.c.b16 %v109, %v108
  %vm118 = vcmask 523264
  %v120 = vsel %vm118, %v81, 0
  %122 = vmatpush.bf16.msra.mxu0 0
  %123 = vmatpush.bf16.msra.mxu0 0
  %124 = vmatpush.bf16.msra.mxu0 0
  %125 = vmatpush.bf16.msra.mxu0 0
  %126 = vmatpush.bf16.msra.mxu0 %v113
  %127 = vmatpush.bf16.msra.mxu0 %v112
  %128 = vmatpush.bf16.msra.mxu0 %v111
  %129 = vmatpush.bf16.msra.mxu0 %v110
  %130 = vmatmul.bf16.gmra.mxu0 %v120
  %v131 = vpop.f32.mrf.mxu0
  %v132 = vadd.f32 %v92, %v131
  %v133 = vpop.f32.mrf.mxu0
  %v134 = vadd.f32 %v92, %v133
  %135 = vdwg.mxu0
  %v136 = vmax.f32 %v132, 0.0
  %v137 = vmax.f32 %v134, 0.0
  %v138 = vpack.c.bf16 %v137, %v136
  %v139 = vld [vmem:[%s5] sm:$0xf]
  %v140 = vld [vmem:[%s5 + $0x4] sm:$0xf]
  %v141 = vld [vmem:[%s5 + $0x8] sm:$0xf]
  %v142 = vld [vmem:[%s5 + $0xc] sm:$0xf]
  %v143 = vld [vmem:[%s5 + $0x10] sm:$0xf]
  %v144 = vld [vmem:[%s5 + $0x14] sm:$0xf]
  %v145 = vld [vmem:[%s5 + $0x18] sm:$0xf]
  %v146 = vld [vmem:[%s5 + $0x1c] sm:$0xf]
  %v147 = vld [vmem:[%s5 + $0x20] sm:$0xf]
  %v148 = vld [vmem:[%s5 + $0x24] sm:$0xf]
  %v149 = vld [vmem:[%s5 + $0x28] sm:$0xf]
  %v150 = vld [vmem:[%s5 + $0x2c] sm:$0xf]
  %v151 = vld [vmem:[%s5 + $0x30] sm:$0xf]
  %v152 = vld [vmem:[%s5 + $0x34] sm:$0xf]
  %v153 = vld [vmem:[%s5 + $0x38] sm:$0xf]
  %v154 = vld [vmem:[%s5 + $0x3c] sm:$0xf]
  %v155 = vld [vmem:[%s6] sm:$0x1]
  %v157 = vperm.slane %v155, 0
  %v175 = vunpack.c.l.b16 %v139
  %v176 = vunpack.c.l.b16 %v140
  %v177 = vunpack.c.l.b16 %v141
  %v178 = vunpack.c.l.b16 %v142
  %v179 = vunpack.c.l.b16 %v143
  %v180 = vunpack.c.l.b16 %v144
  %v181 = vunpack.c.l.b16 %v145
  %v182 = vunpack.c.l.b16 %v146
  %v183 = vunpack.c.l.b16 %v147
  %v184 = vunpack.c.l.b16 %v148
  %v185 = vunpack.c.l.b16 %v149
  %v186 = vunpack.c.l.b16 %v150
  %v187 = vunpack.c.l.b16 %v151
  %v188 = vunpack.c.l.b16 %v152
  %v189 = vunpack.c.l.b16 %v153
  %v190 = vunpack.c.l.b16 %v154
  %v191 = vpack.c.b16 %v176, %v175
  %v192 = vpack.c.b16 %v178, %v177
  %v193 = vpack.c.b16 %v180, %v179
  %v194 = vpack.c.b16 %v182, %v181
  %v195 = vpack.c.b16 %v184, %v183
  %v196 = vpack.c.b16 %v186, %v185
  %v197 = vpack.c.b16 %v188, %v187
  %v198 = vpack.c.b16 %v190, %v189
  %207 = vmatpush.bf16.msra.mxu0 %v198
  %208 = vmatpush.bf16.msra.mxu0 %v197
  %209 = vmatpush.bf16.msra.mxu0 %v196
  %210 = vmatpush.bf16.msra.mxu0 %v195
  %211 = vmatpush.bf16.msra.mxu0 %v194
  %212 = vmatpush.bf16.msra.mxu0 %v193
  %213 = vmatpush.bf16.msra.mxu0 %v192
  %214 = vmatpush.bf16.msra.mxu0 %v191
  %215 = vmatmul.bf16.gmra.mxu0 %v138
  %v216 = vpop.f32.mrf.mxu0
  %v217 = vadd.f32 %v157, %v216
  %v218 = vpop.f32.mrf.mxu0
  %v219 = vadd.f32 %v157, %v218
  %220 = vdwg.mxu0
  %v221 = vmax.f32 %v217, 0.0
  %v222 = vmax.f32 %v219, 0.0
  %v223 = vpack.c.bf16 %v222, %v221
  %v224 = vld [vmem:[%s7] sm:$0xf]
  %v225 = vld [vmem:[%s7 + $0x4] sm:$0xf]
  %v226 = vld [vmem:[%s7 + $0x8] sm:$0xf]
  %v227 = vld [vmem:[%s7 + $0xc] sm:$0xf]
  %v228 = vld [vmem:[%s7 + $0x10] sm:$0xf]
  %v229 = vld [vmem:[%s7 + $0x14] sm:$0xf]
  %v230 = vld [vmem:[%s7 + $0x18] sm:$0xf]
  %v231 = vld [vmem:[%s7 + $0x1c] sm:$0xf]
  %v232 = vld [vmem:[%s8] sm:$0x1]
  %v234 = vperm.slane %v232, 0
  %v244 = vunpack.c.l.b16 %v224
  %v245 = vunpack.c.l.b16 %v225
  %v246 = vunpack.c.l.b16 %v226
  %v247 = vunpack.c.l.b16 %v227
  %v248 = vunpack.c.l.b16 %v228
  %v249 = vunpack.c.l.b16 %v229
  %v250 = vunpack.c.l.b16 %v230
  %v251 = vunpack.c.l.b16 %v231
  %v252 = vpack.c.b16 %v245, %v244
  %v253 = vpack.c.b16 %v247, %v246
  %v254 = vpack.c.b16 %v249, %v248
  %v255 = vpack.c.b16 %v251, %v250
  %v261 = vsel %vm118, %v223, 0
  %263 = vmatpush.bf16.msra.mxu0 0
  %264 = vmatpush.bf16.msra.mxu0 0
  %265 = vmatpush.bf16.msra.mxu0 0
  %266 = vmatpush.bf16.msra.mxu0 0
  %267 = vmatpush.bf16.msra.mxu0 %v255
  %268 = vmatpush.bf16.msra.mxu0 %v254
  %269 = vmatpush.bf16.msra.mxu0 %v253
  %270 = vmatpush.bf16.msra.mxu0 %v252
  %271 = vmatmul.bf16.gmra.mxu0 %v261
  %v272 = vpop.f32.mrf.mxu0
  %v273 = vadd.f32 %v234, %v272
  %v274 = vpop.f32.mrf.mxu0
  %v275 = vadd.f32 %v234, %v274
  %276 = vdwg.mxu0
  %v277 = vmax.f32 %v273, 0.0
  %v278 = vmax.f32 %v275, 0.0
  %v279 = vpack.c.bf16 %v278, %v277
  %v280 = vld [vmem:[%s9] sm:$0xf]
  %v281 = vld [vmem:[%s9 + $0x4] sm:$0xf]
  %v282 = vld [vmem:[%s10] sm:$0x1]
  %v284 = vperm.slane %v282, 0
  %v288 = vunpack.c.l.b16 %v280
  %v289 = vunpack.c.l.b16 %v281
  %v290 = vpack.c.b16 %v289, %v288
  %vm292 = vcmask 130048
  %v294 = vsel %vm292, %v279, 0
  %296 = vmatpush.bf16.msra.mxu0 0
  %297 = vmatpush.bf16.msra.mxu0 0
  %298 = vmatpush.bf16.msra.mxu0 0
  %299 = vmatpush.bf16.msra.mxu0 0
  %300 = vmatpush.bf16.msra.mxu0 0
  %301 = vmatpush.bf16.msra.mxu0 0
  %302 = vmatpush.bf16.msra.mxu0 0
  %303 = vmatpush.bf16.msra.mxu0 %v290
  %304 = vmatmul.bf16.gmra.mxu0 %v294
  %v305 = vpop.f32.mrf.mxu0
  %v306 = vadd.f32 %v284, %v305
  %v307 = vpop.f32.mrf.mxu0
  %v308 = vadd.f32 %v284, %v307
  %309 = vdwg.mxu0
  %vm310 = vcmask 64512
  %311 = vst.msk [vmem:[%s11] sm:$0xff] %vm310, %v306
  %312 = vst.msk [vmem:[%s11 + $0x8] sm:$0xff] %vm310, %v308
  // Predicated region
  $region46: #{_mlp_forward_padded.1} parent=0 // pred_check
    _
  $region47: #{_mlp_forward_padded.1} parent=0 // pred_check_branch
    %314 = sbr.rel (0) target = $region49
  $region48: #{_mlp_forward_padded.1} parent=0 // pred_region
    _
  $region49: #{_mlp_forward_padded.1} parent=0 // pred_fallthru
    _
  // Predicated region
  $region50: #{_mlp_forward_padded.1} parent=0 // pred_check
    _
  $region51: #{_mlp_forward_padded.1} parent=0 // pred_check_branch
    %316 = sbr.rel (0) target = $region53
  $region52: #{_mlp_forward_padded.1} parent=0 // pred_region
    _
  $region53: #{_mlp_forward_padded.1} parent=0 // pred_fallthru
    _

</llo_original>
